<compile_context>
chip_gen: v7x
topology: tpu7x:2x2x1
jax: 0.10.0
libtpu: 0.0.40
codegen_flags: <defaults>
</compile_context>

<pallas_src>
import jax
import jax.numpy as jnp
from jax.experimental import pallas as pl
from jax.experimental.pallas import tpu as pltpu

BN_EPS = 1e-5


# ----------------------------- helpers -----------------------------


def _round_up(n, m):
    return ((n + m - 1) // m) * m


def _full_spec(shape):
    # Whole array as a single block (grid = ()), resident in VMEM.
    return pl.BlockSpec(shape, lambda: tuple(0 for _ in shape))


# ----------------------------- fused kernel -----------------------------


def _make_fused_mlp_kernel(layers_meta, b_real, b_pad):
    """layers_meta: tuple of (kind, d_in_pad, d_out_pad); kind in {"block", "out"}."""
    n_layers = len(layers_meta)
    need_mask = b_real != b_pad
    inv_b = 1.0 / float(b_real)

    def kernel(*args):
        x_ref = args[0]
        param_refs = args[1 : 1 + 2 * n_layers]   # (w, packed[bias/gamma/beta]) per layer
        o_ref = args[1 + 2 * n_layers]
        h_ref = args[2 + 2 * n_layers]             # VMEM scratch: running activation

        if need_mask:
            # Exclude padded batch rows from the BN batch statistics.
            row_ids = jax.lax.broadcasted_iota(jnp.int32, (b_pad, 1), 0)
            row_mask = (row_ids < b_real).astype(jnp.float32)

        h = x_ref[...]
        for li, (kind, din, dout) in enumerate(layers_meta):
            w_ref = param_refs[2 * li]
            p_ref = param_refs[2 * li + 1]        # rows: 0=bias, 1=gamma, 2=beta
            if li > 0:
                h = h_ref[:, :din]                # static slice of VMEM scratch

            z = jnp.dot(h, w_ref[...], preferred_element_type=jnp.float32)
            z = z + p_ref[0:1, :]                 # + bias

            if kind == "block":
                zm = z * row_mask if need_mask else z
                mean = jnp.sum(zm, axis=0, keepdims=True) * inv_b
                ex2 = jnp.sum(zm * zm, axis=0, keepdims=True) * inv_b
                var = jnp.maximum(ex2 - mean * mean, 0.0)   # biased batch variance
                z = p_ref[1:2, :] * (z - mean) * jax.lax.rsqrt(var + BN_EPS) + p_ref[2:3, :]
                z = jnp.maximum(z, 0.0)           # ReLU

            if li == n_layers - 1:
                o_ref[...] = z                    # lane-dense final store
            else:
                h_ref[:, :dout] = z               # keep activation VMEM-resident

    return kernel


# ----------------------------- wrapper -----------------------------


def mlp_forward_pallas(x, params):
    x = x.astype(jnp.float32)
    B, D0 = x.shape
    B_pad = _round_up(max(B, 1), 8)
    D0_pad = _round_up(D0, 128)

    x_pad = jnp.pad(x, ((0, B_pad - B), (0, D0_pad - D0)))

    layers_meta = []
    flat_inputs = [x_pad]
    din, din_pad = D0, D0_pad
    for p in params:
        kind, w, b = p[0], p[1], p[2]
        dout = w.shape[1]
        dout_pad = _round_up(dout, 128)

        w_pad = jnp.pad(
            w.astype(jnp.float32), ((0, din_pad - din), (0, dout_pad - dout))
        )
        # Pack bias / gamma / beta into one sublane-aligned (8, D_pad) array.
        packed = jnp.zeros((8, dout_pad), jnp.float32)
        packed = packed.at[0, :dout].set(b.astype(jnp.float32))
        if kind == "block":
            packed = packed.at[1, :dout].set(p[3].astype(jnp.float32))  # gamma
            packed = packed.at[2, :dout].set(p[4].astype(jnp.float32))  # beta

        layers_meta.append((kind, din_pad, dout_pad))
        flat_inputs += [w_pad, packed]
        din, din_pad = dout, dout_pad

    d_last, d_last_pad = din, din_pad
    max_d = max(m[2] for m in layers_meta)

    kernel = _make_fused_mlp_kernel(tuple(layers_meta), B, B_pad)

    # Advisory cost estimate for XLA scheduling.
    flops = int(sum(2 * B_pad * m[1] * m[2] for m in layers_meta))
    transc = int(sum(m[2] for m in layers_meta if m[0] == "block"))  # rsqrt per feature
    io_bytes = int(4 * (sum(int(a.size) for a in flat_inputs) + B_pad * d_last_pad))

    # VMEM budget: everything (inputs + output + scratch), x2 margin; only raise the
    # scoped limit if we actually exceed the default, and stay under v7x's 64 MiB.
    vmem_est = io_bytes + 4 * B_pad * max_d
    compiler_params = None
    if 2 * vmem_est > (28 << 20):
        compiler_params = pltpu.CompilerParams(
            vmem_limit_bytes=int(min(2 * vmem_est, 48 << 20))
        )

    out_pad = pl.pallas_call(
        kernel,
        out_shape=jax.ShapeDtypeStruct((B_pad, d_last_pad), jnp.float32),
        in_specs=[_full_spec(a.shape) for a in flat_inputs],
        out_specs=_full_spec((B_pad, d_last_pad)),
        scratch_shapes=[pltpu.VMEM((B_pad, max_d), jnp.float32)],
        cost_estimate=pl.CostEstimate(
            flops=flops, transcendentals=transc, bytes_accessed=io_bytes
        ),
        compiler_params=compiler_params,
    )(*flat_inputs)

    return out_pad[:B, :d_last]


# ----------------------------- params & reference -----------------------------


def init_mlp_params(key, input_dim, embed_dims, output_layer):
    """PyTorch-default init (Linear: U(-1/sqrt(fan_in), +); BatchNorm1d: gamma=1, beta=0)."""
    params = []
    d_in = input_dim
    for d_out in embed_dims:
        key, kw, kb = jax.random.split(key, 3)
        bound = 1.0 / jnp.sqrt(d_in)
        w = jax.random.uniform(kw, (d_in, d_out), jnp.float32, -bound, bound)
        b = jax.random.uniform(kb, (d_out,), jnp.float32, -bound, bound)
        gamma = jnp.ones((d_out,), jnp.float32)
        beta = jnp.zeros((d_out,), jnp.float32)
        params.append(("block", w, b, gamma, beta))
        d_in = d_out
    if output_layer:
        key, kw, kb = jax.random.split(key, 3)
        bound = 1.0 / jnp.sqrt(d_in)
        w = jax.random.uniform(kw, (d_in, 1), jnp.float32, -bound, bound)
        b = jax.random.uniform(kb, (1,), jnp.float32, -bound, bound)
        params.append(("out", w, b))
    return params


def mlp_forward_ref(x, params):
    """Pure-JAX reference with identical semantics (training-mode BatchNorm1d)."""
    h = x.astype(jnp.float32)
    for p in params:
        if p[0] == "block":
            _, w, b, gamma, beta = p
            h = h @ w + b
            mean = jnp.mean(h, axis=0, keepdims=True)
            var = jnp.mean((h - mean) ** 2, axis=0, keepdims=True)
            h = gamma * (h - mean) * jax.lax.rsqrt(var + BN_EPS) + beta
            h = jnp.maximum(h, 0.0)
        else:
            _, w, b = p
            h = h @ w + b
    return h


if __name__ == "__main__":
    key = jax.random.PRNGKey(0)
    k_x, k_p = jax.random.split(key)

    batch = 6            # deliberately not a multiple of 8: exercises the BN row mask
    input_dim = 16
    embed_dims = (32, 64)
    output_layer = True

    x = jax.random.normal(k_x, (batch, input_dim), jnp.float32)
    params = init_mlp_params(k_p, input_dim, embed_dims, output_layer)

    out = jax.block_until_ready(mlp_forward_pallas(x, params))
    ref = jax.block_until_ready(mlp_forward_ref(x, params))

    assert out.shape == (batch, 1), out.shape
    assert jnp.allclose(out, ref, atol=2e-4, rtol=2e-4), "mismatch vs JAX reference"

    print("KERNEL_OK")
</pallas_src>

<mosaic_0001>
module attributes {stable_mosaic.version = 11 : i64} {
  func.func @kernel(%arg0: memref<8x128xf32, #tpu.memory_space<vmem>>, %arg1: memref<128x128xf32, #tpu.memory_space<vmem>>, %arg2: memref<8x128xf32, #tpu.memory_space<vmem>>, %arg3: memref<128x128xf32, #tpu.memory_space<vmem>>, %arg4: memref<8x128xf32, #tpu.memory_space<vmem>>, %arg5: memref<128x128xf32, #tpu.memory_space<vmem>>, %arg6: memref<8x128xf32, #tpu.memory_space<vmem>>, %arg7: memref<8x128xf32, #tpu.memory_space<vmem>>, %arg8: memref<8x128xf32, #tpu.memory_space<vmem>>) attributes {dimension_semantics = [], scalar_prefetch = 0 : i64, scratch_operands = 1 : i64, tpu.core_type = #tpu.core_type<tc>} {
    %0 = tpu.iota {dimensions = array<i32: 0>} : vector<8x1xi32>
    %c6_i32 = arith.constant 6 : i32
    %1 = vector.broadcast %c6_i32 : i32 to vector<8x1xi32>
    %2 = arith.cmpi slt, %0, %1 : vector<8x1xi32>
    %3 = arith.extui %2 : vector<8x1xi1> to vector<8x1xi32>
    %4 = arith.sitofp %3 : vector<8x1xi32> to vector<8x1xf32>
    %c0 = arith.constant 0 : index
    %c0_0 = arith.constant 0 : index
    %5 = vector.load %arg0[%c0, %c0_0] : memref<8x128xf32, #tpu.memory_space<vmem>>, vector<8x128xf32>
    %c0_1 = arith.constant 0 : index
    %c0_2 = arith.constant 0 : index
    %6 = vector.load %arg1[%c0_1, %c0_2] : memref<128x128xf32, #tpu.memory_space<vmem>>, vector<128x128xf32>
    %cst = arith.constant dense<0.000000e+00> : vector<8x128xf32>
    %7 = tpu.matmul %5, %6, %cst {dimension_numbers = #tpu.dot_dimension_numbers<[1], [0], [0], [1], [0, 0, 1, 1], [], []>} : vector<8x128xf32>, vector<128x128xf32>, vector<8x128xf32> -> vector<8x128xf32>
    %c0_3 = arith.constant 0 : index
    %c0_4 = arith.constant 0 : index
    %8 = vector.load %arg2[%c0_3, %c0_4] : memref<8x128xf32, #tpu.memory_space<vmem>>, vector<1x128xf32>
    %9 = vector.broadcast %8 : vector<1x128xf32> to vector<8x128xf32>
    %10 = arith.addf %7, %9 : vector<8x128xf32>
    %11 = vector.broadcast %4 : vector<8x1xf32> to vector<8x128xf32>
    %12 = arith.mulf %10, %11 : vector<8x128xf32>
    %cst_5 = arith.constant dense<0.000000e+00> : vector<128xf32>
    %13 = vector.multi_reduction <add>, %12, %cst_5 [0] : vector<8x128xf32> to vector<128xf32>
    %14 = vector.shape_cast %13 : vector<128xf32> to vector<1x128xf32>
    %cst_6 = arith.constant 0.166666672 : f32
    %15 = vector.broadcast %cst_6 : f32 to vector<1x128xf32>
    %16 = arith.mulf %14, %15 : vector<1x128xf32>
    %17 = arith.mulf %12, %12 : vector<8x128xf32>
    %cst_7 = arith.constant dense<0.000000e+00> : vector<128xf32>
    %18 = vector.multi_reduction <add>, %17, %cst_7 [0] : vector<8x128xf32> to vector<128xf32>
    %19 = vector.shape_cast %18 : vector<128xf32> to vector<1x128xf32>
    %cst_8 = arith.constant 0.166666672 : f32
    %20 = vector.broadcast %cst_8 : f32 to vector<1x128xf32>
    %21 = arith.mulf %19, %20 : vector<1x128xf32>
    %22 = arith.mulf %16, %16 : vector<1x128xf32>
    %23 = arith.subf %21, %22 : vector<1x128xf32>
    %cst_9 = arith.constant 0.000000e+00 : f32
    %24 = vector.broadcast %cst_9 : f32 to vector<1x128xf32>
    %25 = arith.maximumf %23, %24 : vector<1x128xf32>
    %c1 = arith.constant 1 : index
    %c0_10 = arith.constant 0 : index
    %26 = vector.load %arg2[%c1, %c0_10] : memref<8x128xf32, #tpu.memory_space<vmem>>, vector<1x128xf32>
    %27 = vector.broadcast %16 : vector<1x128xf32> to vector<8x128xf32>
    %28 = arith.subf %10, %27 : vector<8x128xf32>
    %29 = vector.broadcast %26 : vector<1x128xf32> to vector<8x128xf32>
    %30 = arith.mulf %29, %28 : vector<8x128xf32>
    %cst_11 = arith.constant 9.99999974E-6 : f32
    %31 = vector.broadcast %cst_11 : f32 to vector<1x128xf32>
    %32 = arith.addf %25, %31 : vector<1x128xf32>
    %33 = math.rsqrt %32 : vector<1x128xf32>
    %34 = vector.broadcast %33 : vector<1x128xf32> to vector<8x128xf32>
    %35 = arith.mulf %30, %34 : vector<8x128xf32>
    %c2 = arith.constant 2 : index
    %c0_12 = arith.constant 0 : index
    %36 = vector.load %arg2[%c2, %c0_12] : memref<8x128xf32, #tpu.memory_space<vmem>>, vector<1x128xf32>
    %37 = vector.broadcast %36 : vector<1x128xf32> to vector<8x128xf32>
    %38 = arith.addf %35, %37 : vector<8x128xf32>
    %cst_13 = arith.constant 0.000000e+00 : f32
    %39 = vector.broadcast %cst_13 : f32 to vector<8x128xf32>
    %40 = arith.maximumf %38, %39 : vector<8x128xf32>
    %c0_14 = arith.constant 0 : index
    %c0_15 = arith.constant 0 : index
    %41 = vector.load %arg8[%c0_14, %c0_15] : memref<8x128xf32, #tpu.memory_space<vmem>>, vector<8x128xf32>
    tpu.vector_store %arg8[%c0_14, %c0_15], %40 {strides = array<i32>} : memref<8x128xf32, #tpu.memory_space<vmem>>, vector<8x128xf32>,
    %c0_16 = arith.constant 0 : index
    %c0_17 = arith.constant 0 : index
    %42 = vector.load %arg8[%c0_16, %c0_17] : memref<8x128xf32, #tpu.memory_space<vmem>>, vector<8x128xf32>
    %c0_18 = arith.constant 0 : index
    %c0_19 = arith.constant 0 : index
    %43 = vector.load %arg3[%c0_18, %c0_19] : memref<128x128xf32, #tpu.memory_space<vmem>>, vector<128x128xf32>
    %cst_20 = arith.constant dense<0.000000e+00> : vector<8x128xf32>
    %44 = tpu.matmul %42, %43, %cst_20 {dimension_numbers = #tpu.dot_dimension_numbers<[1], [0], [0], [1], [0, 0, 1, 1], [], []>} : vector<8x128xf32>, vector<128x128xf32>, vector<8x128xf32> -> vector<8x128xf32>
    %c0_21 = arith.constant 0 : index
    %c0_22 = arith.constant 0 : index
    %45 = vector.load %arg4[%c0_21, %c0_22] : memref<8x128xf32, #tpu.memory_space<vmem>>, vector<1x128xf32>
    %46 = vector.broadcast %45 : vector<1x128xf32> to vector<8x128xf32>
    %47 = arith.addf %44, %46 : vector<8x128xf32>
    %48 = vector.broadcast %4 : vector<8x1xf32> to vector<8x128xf32>
    %49 = arith.mulf %47, %48 : vector<8x128xf32>
    %cst_23 = arith.constant dense<0.000000e+00> : vector<128xf32>
    %50 = vector.multi_reduction <add>, %49, %cst_23 [0] : vector<8x128xf32> to vector<128xf32>
    %51 = vector.shape_cast %50 : vector<128xf32> to vector<1x128xf32>
    %cst_24 = arith.constant 0.166666672 : f32
    %52 = vector.broadcast %cst_24 : f32 to vector<1x128xf32>
    %53 = arith.mulf %51, %52 : vector<1x128xf32>
    %54 = arith.mulf %49, %49 : vector<8x128xf32>
    %cst_25 = arith.constant dense<0.000000e+00> : vector<128xf32>
    %55 = vector.multi_reduction <add>, %54, %cst_25 [0] : vector<8x128xf32> to vector<128xf32>
    %56 = vector.shape_cast %55 : vector<128xf32> to vector<1x128xf32>
    %cst_26 = arith.constant 0.166666672 : f32
    %57 = vector.broadcast %cst_26 : f32 to vector<1x128xf32>
    %58 = arith.mulf %56, %57 : vector<1x128xf32>
    %59 = arith.mulf %53, %53 : vector<1x128xf32>
    %60 = arith.subf %58, %59 : vector<1x128xf32>
    %cst_27 = arith.constant 0.000000e+00 : f32
    %61 = vector.broadcast %cst_27 : f32 to vector<1x128xf32>
    %62 = arith.maximumf %60, %61 : vector<1x128xf32>
    %c1_28 = arith.constant 1 : index
    %c0_29 = arith.constant 0 : index
    %63 = vector.load %arg4[%c1_28, %c0_29] : memref<8x128xf32, #tpu.memory_space<vmem>>, vector<1x128xf32>
    %64 = vector.broadcast %53 : vector<1x128xf32> to vector<8x128xf32>
    %65 = arith.subf %47, %64 : vector<8x128xf32>
    %66 = vector.broadcast %63 : vector<1x128xf32> to vector<8x128xf32>
    %67 = arith.mulf %66, %65 : vector<8x128xf32>
    %cst_30 = arith.constant 9.99999974E-6 : f32
    %68 = vector.broadcast %cst_30 : f32 to vector<1x128xf32>
    %69 = arith.addf %62, %68 : vector<1x128xf32>
    %70 = math.rsqrt %69 : vector<1x128xf32>
    %71 = vector.broadcast %70 : vector<1x128xf32> to vector<8x128xf32>
    %72 = arith.mulf %67, %71 : vector<8x128xf32>
    %c2_31 = arith.constant 2 : index
    %c0_32 = arith.constant 0 : index
    %73 = vector.load %arg4[%c2_31, %c0_32] : memref<8x128xf32, #tpu.memory_space<vmem>>, vector<1x128xf32>
    %74 = vector.broadcast %73 : vector<1x128xf32> to vector<8x128xf32>
    %75 = arith.addf %72, %74 : vector<8x128xf32>
    %cst_33 = arith.constant 0.000000e+00 : f32
    %76 = vector.broadcast %cst_33 : f32 to vector<8x128xf32>
    %77 = arith.maximumf %75, %76 : vector<8x128xf32>
    %c0_34 = arith.constant 0 : index
    %c0_35 = arith.constant 0 : index
    %78 = vector.load %arg8[%c0_34, %c0_35] : memref<8x128xf32, #tpu.memory_space<vmem>>, vector<8x128xf32>
    tpu.vector_store %arg8[%c0_34, %c0_35], %77 {strides = array<i32>} : memref<8x128xf32, #tpu.memory_space<vmem>>, vector<8x128xf32>,
    %c0_36 = arith.constant 0 : index
    %c0_37 = arith.constant 0 : index
    %79 = vector.load %arg8[%c0_36, %c0_37] : memref<8x128xf32, #tpu.memory_space<vmem>>, vector<8x128xf32>
    %c0_38 = arith.constant 0 : index
    %c0_39 = arith.constant 0 : index
    %80 = vector.load %arg5[%c0_38, %c0_39] : memref<128x128xf32, #tpu.memory_space<vmem>>, vector<128x128xf32>
    %cst_40 = arith.constant dense<0.000000e+00> : vector<8x128xf32>
    %81 = tpu.matmul %79, %80, %cst_40 {dimension_numbers = #tpu.dot_dimension_numbers<[1], [0], [0], [1], [0, 0, 1, 1], [], []>} : vector<8x128xf32>, vector<128x128xf32>, vector<8x128xf32> -> vector<8x128xf32>
    %c0_41 = arith.constant 0 : index
    %c0_42 = arith.constant 0 : index
    %82 = vector.load %arg6[%c0_41, %c0_42] : memref<8x128xf32, #tpu.memory_space<vmem>>, vector<1x128xf32>
    %83 = vector.broadcast %82 : vector<1x128xf32> to vector<8x128xf32>
    %84 = arith.addf %81, %83 : vector<8x128xf32>
    %c0_43 = arith.constant 0 : index
    %c0_44 = arith.constant 0 : index
    %85 = vector.load %arg7[%c0_43, %c0_44] : memref<8x128xf32, #tpu.memory_space<vmem>>, vector<8x128xf32>
    tpu.vector_store %arg7[%c0_43, %c0_44], %84 {strides = array<i32>} : memref<8x128xf32, #tpu.memory_space<vmem>>, vector<8x128xf32>,
    return
  }
}

</mosaic_0001>

<llo_original>
// kernel: tpu_custom_call.1
$region0: #{tpu_custom_call.1}
  #allocation0 [shape = 'u32[]', space=smem, size = 0x4, offset = 0x4, fixed_abs, tag = 'smem constant byte address 0x4 - core index']
  #allocation1 [shape = 'u32[144,128]{1,0:T(1,128)}', space=vmem, size = 0x12000, scoped, tag = 'internal scratch']
  #allocation2 [shape = 'f32[8,128]{1,0:T(8,128)}', space=vmem, size = 0x1000, scoped, tag = 'scratch operand']
  %s0 = inlined_call_operand.hbm [shape: f32[8,128], index: 0, kind: input, shape index: {}]
  %s1 = inlined_call_operand.hbm [shape: f32[128,128], index: 1, kind: input, shape index: {}]
  %s2 = inlined_call_operand.hbm [shape: f32[8,128], index: 2, kind: input, shape index: {}]
  %s3 = inlined_call_operand.hbm [shape: f32[128,128], index: 3, kind: input, shape index: {}]
  %s4 = inlined_call_operand.vmem [shape: f32[8,128], index: 4, kind: input, shape index: {}]
  %s5 = inlined_call_operand.hbm [shape: f32[128,128], index: 5, kind: input, shape index: {}]
  %s6 = inlined_call_operand.vmem [shape: f32[8,128], index: 6, kind: input, shape index: {}]
  %s7 = inlined_call_operand.hbm [shape: f32[8,128], index: 7, kind: output, shape index: {}]
  %s8 = sld [smem:[#allocation0]]
  $region58: #{tpu_custom_call.1} parent=0
    _
  %s10 = ssub.s32 1, %s8
  %s11 = scalar_select 0, %s10, %s8
  $region1: #{tpu_custom_call.1} parent=0
    #allocation3 [shape = 'u8[4096]{0}', space=vmem, size = 0x1000, scoped, tag = 'input window, operand 0, single buffered']
    #allocation4 [shape = 's32[1]{0}', space=sflag, size = 0x4, scoped, tag = 'scoped memory for tpu_custom_call.1']
    #allocation5 [shape = 's32[1]{0}', space=sflag, size = 0x4, scoped, tag = 'scoped memory for tpu_custom_call.1']
    #allocation6 [shape = 'u8[65536]{0}', space=vmem, size = 0x10000, scoped, tag = 'input window, operand 1, single buffered']
    #allocation7 [shape = 's32[1]{0}', space=sflag, size = 0x4, scoped, tag = 'scoped memory for tpu_custom_call.1']
    #allocation8 [shape = 'u8[4096]{0}', space=vmem, size = 0x1000, scoped, tag = 'input window, operand 2, single buffered']
    #allocation9 [shape = 'u8[65536]{0}', space=vmem, size = 0x10000, scoped, tag = 'input window, operand 3, single buffered']
    #allocation10 [shape = 's32[1]{0}', space=sflag, size = 0x4, scoped, tag = 'scoped memory for tpu_custom_call.1']
    #allocation11 [shape = 'u8[65536]{0}', space=vmem, size = 0x10000, scoped, tag = 'input window, operand 5, single buffered']
    #allocation12 [shape = 'u8[4096]{0}', space=vmem, size = 0x1000, scoped, tag = 'output window, operand 0, single buffered']
    %12 = vsyncpa [#allocation4], 0
    %13 = vsyncpa [#allocation7], 0
    %14 = vsyncpa [#allocation10], 0
    %15 = vsyncpa [#allocation5], 0
    // Predicated region
    $region2: #{tpu_custom_call.1} parent=1 // pred_check
      _
    $region3: #{tpu_custom_call.1} parent=1 // pred_check_branch
      %17 = sbr.rel (0) target = $region5
    $region4: #{tpu_custom_call.1} parent=1 // pred_region
      %s19 = ssub.s32 128, 128
      %20 = vsyncadd [#allocation4], %s19
      %s22 = sshll.u32 [#allocation3], 4
      %s23 = int_to_ptr.vmem [resolvable:$true] %s22
      %25 = dma.hbm_to_vmem [thread:$0]  %s0, 128, %s23, [#allocation4]
    $region5: #{tpu_custom_call.1} parent=1 // pred_fallthru
      _
    // Predicated region
    $region6: #{tpu_custom_call.1} parent=1 // pred_check
      _
    $region7: #{tpu_custom_call.1} parent=1 // pred_check_branch
      %27 = sbr.rel (0) target = $region9
    $region8: #{tpu_custom_call.1} parent=1 // pred_region
      %s29 = ssub.s32 2048, 2048
      %30 = vsyncadd [#allocation7], %s29
      %s31 = sshll.u32 [#allocation6], 4
      %s32 = int_to_ptr.vmem [resolvable:$true] %s31
      %37 = dma.hbm_to_vmem [thread:$0]  %s1, 2048, %s32, [#allocation7], 128, 128, 8
    $region9: #{tpu_custom_call.1} parent=1 // pred_fallthru
      _
    // Predicated region
    $region10: #{tpu_custom_call.1} parent=1 // pred_check
      _
    $region11: #{tpu_custom_call.1} parent=1 // pred_check_branch
      %39 = sbr.rel (0) target = $region13
    $region12: #{tpu_custom_call.1} parent=1 // pred_region
      %s41 = ssub.s32 128, 128
      %42 = vsyncadd [#allocation7], %s41
      %s44 = sshll.u32 [#allocation8], 4
      %s45 = int_to_ptr.vmem [resolvable:$true] %s44
      %47 = dma.hbm_to_vmem [thread:$0]  %s2, 128, %s45, [#allocation7]
    $region13: #{tpu_custom_call.1} parent=1 // pred_fallthru
      _
    // Predicated region
    $region14: #{tpu_custom_call.1} parent=1 // pred_check
      _
    $region15: #{tpu_custom_call.1} parent=1 // pred_check_branch
      %49 = sbr.rel (0) target = $region17
    $region16: #{tpu_custom_call.1} parent=1 // pred_region
      %s51 = ssub.s32 2048, 2048
      %52 = vsyncadd [#allocation10], %s51
      %s53 = sshll.u32 [#allocation9], 4
      %s54 = int_to_ptr.vmem [resolvable:$true] %s53
      %59 = dma.hbm_to_vmem [thread:$0]  %s3, 2048, %s54, [#allocation10], 128, 128, 8
    $region17: #{tpu_custom_call.1} parent=1 // pred_fallthru
      _
    // Predicated region
    $region18: #{tpu_custom_call.1} parent=1 // pred_check
      _
    $region19: #{tpu_custom_call.1} parent=1 // pred_check_branch
      %61 = sbr.rel (0) target = $region21
    $region20: #{tpu_custom_call.1} parent=1 // pred_region
      _
    $region21: #{tpu_custom_call.1} parent=1 // pred_fallthru
      _
    // Predicated region
    $region22: #{tpu_custom_call.1} parent=1 // pred_check
      _
    $region23: #{tpu_custom_call.1} parent=1 // pred_check_branch
      %63 = sbr.rel (0) target = $region25
    $region24: #{tpu_custom_call.1} parent=1 // pred_region
      %s65 = ssub.s32 2048, 2048
      %66 = vsyncadd [#allocation10], %s65
      %s67 = sshll.u32 [#allocation11], 4
      %s68 = int_to_ptr.vmem [resolvable:$true] %s67
      %73 = dma.hbm_to_vmem [thread:$0]  %s5, 2048, %s68, [#allocation10], 128, 128, 8
    $region25: #{tpu_custom_call.1} parent=1 // pred_fallthru
      _
    // Predicated region
    $region26: #{tpu_custom_call.1} parent=1 // pred_check
      _
    $region27: #{tpu_custom_call.1} parent=1 // pred_check_branch
      %75 = sbr.rel (0) target = $region29
    $region28: #{tpu_custom_call.1} parent=1 // pred_region
      _
    $region29: #{tpu_custom_call.1} parent=1 // pred_fallthru
      _
    // Predicated region
    $region30: #{tpu_custom_call.1} parent=1 // pred_check
      _
    $region31: #{tpu_custom_call.1} parent=1 // pred_check_branch
      %77 = sbr.rel (0) target = $region33
    $region32: #{tpu_custom_call.1} parent=1 // pred_region
      %78 = dma.done [#allocation4], 128
    $region33: #{tpu_custom_call.1} parent=1 // pred_fallthru
      _
    // Predicated region
    $region34: #{tpu_custom_call.1} parent=1 // pred_check
      _
    $region35: #{tpu_custom_call.1} parent=1 // pred_check_branch
      %80 = sbr.rel (0) target = $region37
    $region36: #{tpu_custom_call.1} parent=1 // pred_region
      %81 = dma.done [#allocation7], 2048
    $region37: #{tpu_custom_call.1} parent=1 // pred_fallthru
      _
    // Predicated region
    $region38: #{tpu_custom_call.1} parent=1 // pred_check
      _
    $region39: #{tpu_custom_call.1} parent=1 // pred_check_branch
      %83 = sbr.rel (0) target = $region41
    $region40: #{tpu_custom_call.1} parent=1 // pred_region
      %84 = dma.done [#allocation7], 128
    $region41: #{tpu_custom_call.1} parent=1 // pred_fallthru
      _
    // Predicated region
    $region42: #{tpu_custom_call.1} parent=1 // pred_check
      _
    $region43: #{tpu_custom_call.1} parent=1 // pred_check_branch
      %86 = sbr.rel (0) target = $region45
    $region44: #{tpu_custom_call.1} parent=1 // pred_region
      %87 = dma.done [#allocation10], 2048
    $region45: #{tpu_custom_call.1} parent=1 // pred_fallthru
      _
    // Predicated region
    $region46: #{tpu_custom_call.1} parent=1 // pred_check
      _
    $region47: #{tpu_custom_call.1} parent=1 // pred_check_branch
      %89 = sbr.rel (0) target = $region49
    $region48: #{tpu_custom_call.1} parent=1 // pred_region
      %90 = dma.done [#allocation10], 2048
    $region49: #{tpu_custom_call.1} parent=1 // pred_fallthru
      _
    %v91 = vlaneseq
    %v92 = vshrl.u32 %v91, 7
    %vm93 = vcmp.lt.s32.totalorder %v92, 6
    %v94 = vsel %vm93, 1, 0
    %v95 = vcvt.s32.f32 %v94
    %v96 = vld [vmem:[#allocation3] sm:$0xff]
    %v97 = vld [vmem:[#allocation6] sm:$0xff]
    %v98 = vld [vmem:[#allocation6 + $0x8] sm:$0xff]
    %v99 = vld [vmem:[#allocation6 + $0x10] sm:$0xff]
    %v100 = vld [vmem:[#allocation6 + $0x18] sm:$0xff]
    %v101 = vld [vmem:[#allocation6 + $0x20] sm:$0xff]
    %v102 = vld [vmem:[#allocation6 + $0x28] sm:$0xff]
    %v103 = vld [vmem:[#allocation6 + $0x30] sm:$0xff]
    %v104 = vld [vmem:[#allocation6 + $0x38] sm:$0xff]
    %v105 = vld [vmem:[#allocation6 + $0x40] sm:$0xff]
    %v106 = vld [vmem:[#allocation6 + $0x48] sm:$0xff]
    %v107 = vld [vmem:[#allocation6 + $0x50] sm:$0xff]
    %v108 = vld [vmem:[#allocation6 + $0x58] sm:$0xff]
    %v109 = vld [vmem:[#allocation6 + $0x60] sm:$0xff]
    %v110 = vld [vmem:[#allocation6 + $0x68] sm:$0xff]
    %v111 = vld [vmem:[#allocation6 + $0x70] sm:$0xff]
    %v112 = vld [vmem:[#allocation6 + $0x78] sm:$0xff]
    %v113 = vld [vmem:[#allocation8] sm:$0x1]
    %v114 = vlaneseq
    %v115 = vshrl.u32 %v114, 7
    %v116 = vsub.s32 0, %v115
    %v117 = vrot.slane %v113, %v116
    %118 = vmatprep.subr.mxu0 0.0
    %119 = vmatpush1.msra.mxu0 %v97
    %120 = vmatprep.subr.mxu0 0.0
    %121 = vmatpush1.msra.mxu0 %v98
    %122 = vmatprep.subr.mxu0 0.0
    %123 = vmatpush1.msra.mxu0 %v99
    %124 = vmatprep.subr.mxu0 0.0
    %125 = vmatpush1.msra.mxu0 %v100
    %126 = vmatprep.subr.mxu0 0.0
    %127 = vmatpush1.msra.mxu0 %v101
    %128 = vmatprep.subr.mxu0 0.0
    %129 = vmatpush1.msra.mxu0 %v102
    %130 = vmatprep.subr.mxu0 0.0
    %131 = vmatpush1.msra.mxu0 %v103
    %132 = vmatprep.subr.mxu0 0.0
    %133 = vmatpush1.msra.mxu0 %v104
    %134 = vmatprep.subr.mxu0 0.0
    %135 = vmatpush1.msra.mxu0 %v105
    %136 = vmatprep.subr.mxu0 0.0
    %137 = vmatpush1.msra.mxu0 %v106
    %138 = vmatprep.subr.mxu0 0.0
    %139 = vmatpush1.msra.mxu0 %v107
    %140 = vmatprep.subr.mxu0 0.0
    %141 = vmatpush1.msra.mxu0 %v108
    %142 = vmatprep.subr.mxu0 0.0
    %143 = vmatpush1.msra.mxu0 %v109
    %144 = vmatprep.subr.mxu0 0.0
    %145 = vmatpush1.msra.mxu0 %v110
    %146 = vmatprep.subr.mxu0 0.0
    %147 = vmatpush1.msra.mxu0 %v111
    %148 = vmatprep.subr.mxu0 0.0
    %149 = vmatpush1.msra.mxu0 %v112
    %150 = vmatprep.subr.mxu0 0.0
    %151 = vmatpush1.msra.mxu0 0.0
    %152 = vmatprep.subr.mxu0 0.0
    %153 = vmatpush1.msra.mxu0 0.0
    %154 = vmatprep.subr.mxu0 0.0
    %155 = vmatpush1.msra.mxu0 0.0
    %156 = vmatprep.subr.mxu0 0.0
    %157 = vmatpush1.msra.mxu0 0.0
    %158 = vmatprep.subr.mxu0 0.0
    %159 = vmatpush1.msra.mxu0 0.0
    %160 = vmatprep.subr.mxu0 0.0
    %161 = vmatpush1.msra.mxu0 0.0
    %162 = vmatprep.subr.mxu0 0.0
    %163 = vmatpush1.msra.mxu0 0.0
    %164 = vmatprep.subr.mxu0 0.0
    %165 = vmatpush1.msra.mxu0 0.0
    %166 = vmatprep.subr.mxu0 0.0
    %167 = vmatpush1.msra.mxu0 0.0
    %168 = vmatprep.subr.mxu0 0.0
    %169 = vmatpush1.msra.mxu0 0.0
    %170 = vmatprep.subr.mxu0 0.0
    %171 = vmatpush1.msra.mxu0 0.0
    %172 = vmatprep.subr.mxu0 0.0
    %173 = vmatpush1.msra.mxu0 0.0
    %174 = vmatprep.subr.mxu0 0.0
    %175 = vmatpush1.msra.mxu0 0.0
    %176 = vmatprep.subr.mxu0 0.0
    %177 = vmatpush1.msra.mxu0 0.0
    %178 = vmatprep.subr.mxu0 0.0
    %179 = vmatpush1.msra.mxu0 0.0
    %180 = vmatprep.subr.mxu0 0.0
    %181 = vmatpush1.msra.mxu0 0.0
    %182 = vmatprep.mubr.f32.mxu0 0.0
    %183 = vmatmul.mubr.f32.gmra.mrb[0].mxu0 %v96
    %v184 = vpop.f32.mrb[0].mxu0
    %v185 = vadd.f32 %v117, %v184
    %v186 = vpop.f32.mrb[0].mxu0
    %187 = vdwg.mxu0
    %v188 = vmul.f32 %v185, %v95
    %v189 = vrot.slane %v188, 4
    %v190 = vadd.f32 %v188, %v189
    %v191 = vrot.slane %v190, 2
    %v192 = vadd.f32 %v190, %v191
    %v193 = vrot.slane %v192, 1
    %v194 = vadd.f32 %v192, %v193
    %v195 = vmul.f32 %v194, 0.16666667
    %v196 = vmul.f32 %v188, %v188
    %v197 = vrot.slane %v196, 4
    %v198 = vadd.f32 %v196, %v197
    %v199 = vrot.slane %v198, 2
    %v200 = vadd.f32 %v198, %v199
    %v201 = vrot.slane %v200, 1
    %v202 = vadd.f32 %v200, %v201
    %v203 = vmul.f32 %v202, 0.16666667
    %v204 = vmul.f32 %v195, %v195
    %v205 = vsub.f32 %v203, %v204
    %v206 = vmax.f32 %v205, 0.0
    %v207 = vld [vmem:[#allocation8 + $0x1] sm:$0x1]
    %v208 = vsub.f32 %v185, %v195
    %v209 = vlaneseq
    %v210 = vshrl.u32 %v209, 7
    %v211 = vsub.s32 0, %v210
    %v212 = vrot.slane %v207, %v211
    %v213 = vmul.f32 %v212, %v208
    %v214 = vadd.f32 %v206, 1e-05
    %v215 = vrsqrt.pop %v214
    %v216 = vmul.f32 %v213, %v215
    %v217 = vld [vmem:[#allocation8 + $0x2] sm:$0x1]
    %v218 = vlaneseq
    %v219 = vshrl.u32 %v218, 7
    %v220 = vsub.s32 0, %v219
    %v221 = vrot.slane %v217, %v220
    %v222 = vadd.f32 %v216, %v221
    %v223 = vmax.f32 %v222, 0.0
    %224 = vst [vmem:[#allocation2] sm:$0xff] %v223
    %v225 = vld [vmem:[#allocation2] sm:$0xff]
    %v226 = vld [vmem:[#allocation9] sm:$0xff]
    %v227 = vld [vmem:[#allocation9 + $0x8] sm:$0xff]
    %v228 = vld [vmem:[#allocation9 + $0x10] sm:$0xff]
    %v229 = vld [vmem:[#allocation9 + $0x18] sm:$0xff]
    %v230 = vld [vmem:[#allocation9 + $0x20] sm:$0xff]
    %v231 = vld [vmem:[#allocation9 + $0x28] sm:$0xff]
    %v232 = vld [vmem:[#allocation9 + $0x30] sm:$0xff]
    %v233 = vld [vmem:[#allocation9 + $0x38] sm:$0xff]
    %v234 = vld [vmem:[#allocation9 + $0x40] sm:$0xff]
    %v235 = vld [vmem:[#allocation9 + $0x48] sm:$0xff]
    %v236 = vld [vmem:[#allocation9 + $0x50] sm:$0xff]
    %v237 = vld [vmem:[#allocation9 + $0x58] sm:$0xff]
    %v238 = vld [vmem:[#allocation9 + $0x60] sm:$0xff]
    %v239 = vld [vmem:[#allocation9 + $0x68] sm:$0xff]
    %v240 = vld [vmem:[#allocation9 + $0x70] sm:$0xff]
    %v241 = vld [vmem:[#allocation9 + $0x78] sm:$0xff]
    %v242 = vld [vmem:[%s4] sm:$0x1]
    %v243 = vlaneseq
    %v244 = vshrl.u32 %v243, 7
    %v245 = vsub.s32 0, %v244
    %v246 = vrot.slane %v242, %v245
    %247 = vmatprep.subr.mxu0 0.0
    %248 = vmatpush1.msra.mxu0 %v226
    %249 = vmatprep.subr.mxu0 0.0
    %250 = vmatpush1.msra.mxu0 %v227
    %251 = vmatprep.subr.mxu0 0.0
    %252 = vmatpush1.msra.mxu0 %v228
    %253 = vmatprep.subr.mxu0 0.0
    %254 = vmatpush1.msra.mxu0 %v229
    %255 = vmatprep.subr.mxu0 0.0
    %256 = vmatpush1.msra.mxu0 %v230
    %257 = vmatprep.subr.mxu0 0.0
    %258 = vmatpush1.msra.mxu0 %v231
    %259 = vmatprep.subr.mxu0 0.0
    %260 = vmatpush1.msra.mxu0 %v232
    %261 = vmatprep.subr.mxu0 0.0
    %262 = vmatpush1.msra.mxu0 %v233
    %263 = vmatprep.subr.mxu0 0.0
    %264 = vmatpush1.msra.mxu0 %v234
    %265 = vmatprep.subr.mxu0 0.0
    %266 = vmatpush1.msra.mxu0 %v235
    %267 = vmatprep.subr.mxu0 0.0
    %268 = vmatpush1.msra.mxu0 %v236
    %269 = vmatprep.subr.mxu0 0.0
    %270 = vmatpush1.msra.mxu0 %v237
    %271 = vmatprep.subr.mxu0 0.0
    %272 = vmatpush1.msra.mxu0 %v238
    %273 = vmatprep.subr.mxu0 0.0
    %274 = vmatpush1.msra.mxu0 %v239
    %275 = vmatprep.subr.mxu0 0.0
    %276 = vmatpush1.msra.mxu0 %v240
    %277 = vmatprep.subr.mxu0 0.0
    %278 = vmatpush1.msra.mxu0 %v241
    %279 = vmatprep.subr.mxu0 0.0
    %280 = vmatpush1.msra.mxu0 0.0
    %281 = vmatprep.subr.mxu0 0.0
    %282 = vmatpush1.msra.mxu0 0.0
    %283 = vmatprep.subr.mxu0 0.0
    %284 = vmatpush1.msra.mxu0 0.0
    %285 = vmatprep.subr.mxu0 0.0
    %286 = vmatpush1.msra.mxu0 0.0
    %287 = vmatprep.subr.mxu0 0.0
    %288 = vmatpush1.msra.mxu0 0.0
    %289 = vmatprep.subr.mxu0 0.0
    %290 = vmatpush1.msra.mxu0 0.0
    %291 = vmatprep.subr.mxu0 0.0
    %292 = vmatpush1.msra.mxu0 0.0
    %293 = vmatprep.subr.mxu0 0.0
    %294 = vmatpush1.msra.mxu0 0.0
    %295 = vmatprep.subr.mxu0 0.0
    %296 = vmatpush1.msra.mxu0 0.0
    %297 = vmatprep.subr.mxu0 0.0
    %298 = vmatpush1.msra.mxu0 0.0
    %299 = vmatprep.subr.mxu0 0.0
    %300 = vmatpush1.msra.mxu0 0.0
    %301 = vmatprep.subr.mxu0 0.0
    %302 = vmatpush1.msra.mxu0 0.0
    %303 = vmatprep.subr.mxu0 0.0
    %304 = vmatpush1.msra.mxu0 0.0
    %305 = vmatprep.subr.mxu0 0.0
    %306 = vmatpush1.msra.mxu0 0.0
    %307 = vmatprep.subr.mxu0 0.0
    %308 = vmatpush1.msra.mxu0 0.0
    %309 = vmatprep.subr.mxu0 0.0
    %310 = vmatpush1.msra.mxu0 0.0
    %311 = vmatprep.mubr.f32.mxu0 0.0
    %312 = vmatmul.mubr.f32.gmra.mrb[0].mxu0 %v225
    %v313 = vpop.f32.mrb[0].mxu0
    %v314 = vadd.f32 %v246, %v313
    %v315 = vpop.f32.mrb[0].mxu0
    %316 = vdwg.mxu0
    %v317 = vmul.f32 %v314, %v95
    %v318 = vrot.slane %v317, 4
    %v319 = vadd.f32 %v317, %v318
    %v320 = vrot.slane %v319, 2
    %v321 = vadd.f32 %v319, %v320
    %v322 = vrot.slane %v321, 1
    %v323 = vadd.f32 %v321, %v322
    %v324 = vmul.f32 %v323, 0.16666667
    %v325 = vmul.f32 %v317, %v317
    %v326 = vrot.slane %v325, 4
    %v327 = vadd.f32 %v325, %v326
    %v328 = vrot.slane %v327, 2
    %v329 = vadd.f32 %v327, %v328
    %v330 = vrot.slane %v329, 1
    %v331 = vadd.f32 %v329, %v330
    %v332 = vmul.f32 %v331, 0.16666667
    %v333 = vmul.f32 %v324, %v324
    %v334 = vsub.f32 %v332, %v333
    %v335 = vmax.f32 %v334, 0.0
    %v336 = vld [vmem:[%s4 + $0x1] sm:$0x1]
    %v337 = vsub.f32 %v314, %v324
    %v338 = vlaneseq
    %v339 = vshrl.u32 %v338, 7
    %v340 = vsub.s32 0, %v339
    %v341 = vrot.slane %v336, %v340
    %v342 = vmul.f32 %v341, %v337
    %v343 = vadd.f32 %v335, 1e-05
    %v344 = vrsqrt.pop %v343
    %v345 = vmul.f32 %v342, %v344
    %v346 = vld [vmem:[%s4 + $0x2] sm:$0x1]
    %v347 = vlaneseq
    %v348 = vshrl.u32 %v347, 7
    %v349 = vsub.s32 0, %v348
    %v350 = vrot.slane %v346, %v349
    %v351 = vadd.f32 %v345, %v350
    %v352 = vmax.f32 %v351, 0.0
    %353 = vst [vmem:[#allocation2] sm:$0xff] %v352
    %v354 = vld [vmem:[#allocation2] sm:$0xff]
    %v355 = vld [vmem:[#allocation11] sm:$0xff]
    %v356 = vld [vmem:[#allocation11 + $0x8] sm:$0xff]
    %v357 = vld [vmem:[#allocation11 + $0x10] sm:$0xff]
    %v358 = vld [vmem:[#allocation11 + $0x18] sm:$0xff]
    %v359 = vld [vmem:[#allocation11 + $0x20] sm:$0xff]
    %v360 = vld [vmem:[#allocation11 + $0x28] sm:$0xff]
    %v361 = vld [vmem:[#allocation11 + $0x30] sm:$0xff]
    %v362 = vld [vmem:[#allocation11 + $0x38] sm:$0xff]
    %v363 = vld [vmem:[#allocation11 + $0x40] sm:$0xff]
    %v364 = vld [vmem:[#allocation11 + $0x48] sm:$0xff]
    %v365 = vld [vmem:[#allocation11 + $0x50] sm:$0xff]
    %v366 = vld [vmem:[#allocation11 + $0x58] sm:$0xff]
    %v367 = vld [vmem:[#allocation11 + $0x60] sm:$0xff]
    %v368 = vld [vmem:[#allocation11 + $0x68] sm:$0xff]
    %v369 = vld [vmem:[#allocation11 + $0x70] sm:$0xff]
    %v370 = vld [vmem:[#allocation11 + $0x78] sm:$0xff]
    %v371 = vld [vmem:[%s6] sm:$0x1]
    %v372 = vlaneseq
    %v373 = vshrl.u32 %v372, 7
    %v374 = vsub.s32 0, %v373
    %v375 = vrot.slane %v371, %v374
    %376 = vmatprep.subr.mxu0 0.0
    %377 = vmatpush1.msra.mxu0 %v355
    %378 = vmatprep.subr.mxu0 0.0
    %379 = vmatpush1.msra.mxu0 %v356
    %380 = vmatprep.subr.mxu0 0.0
    %381 = vmatpush1.msra.mxu0 %v357
    %382 = vmatprep.subr.mxu0 0.0
    %383 = vmatpush1.msra.mxu0 %v358
    %384 = vmatprep.subr.mxu0 0.0
    %385 = vmatpush1.msra.mxu0 %v359
    %386 = vmatprep.subr.mxu0 0.0
    %387 = vmatpush1.msra.mxu0 %v360
    %388 = vmatprep.subr.mxu0 0.0
    %389 = vmatpush1.msra.mxu0 %v361
    %390 = vmatprep.subr.mxu0 0.0
    %391 = vmatpush1.msra.mxu0 %v362
    %392 = vmatprep.subr.mxu0 0.0
    %393 = vmatpush1.msra.mxu0 %v363
    %394 = vmatprep.subr.mxu0 0.0
    %395 = vmatpush1.msra.mxu0 %v364
    %396 = vmatprep.subr.mxu0 0.0
    %397 = vmatpush1.msra.mxu0 %v365
    %398 = vmatprep.subr.mxu0 0.0
    %399 = vmatpush1.msra.mxu0 %v366
    %400 = vmatprep.subr.mxu0 0.0
    %401 = vmatpush1.msra.mxu0 %v367
    %402 = vmatprep.subr.mxu0 0.0
    %403 = vmatpush1.msra.mxu0 %v368
    %404 = vmatprep.subr.mxu0 0.0
    %405 = vmatpush1.msra.mxu0 %v369
    %406 = vmatprep.subr.mxu0 0.0
    %407 = vmatpush1.msra.mxu0 %v370
    %408 = vmatprep.subr.mxu0 0.0
    %409 = vmatpush1.msra.mxu0 0.0
    %410 = vmatprep.subr.mxu0 0.0
    %411 = vmatpush1.msra.mxu0 0.0
    %412 = vmatprep.subr.mxu0 0.0
    %413 = vmatpush1.msra.mxu0 0.0
    %414 = vmatprep.subr.mxu0 0.0
    %415 = vmatpush1.msra.mxu0 0.0
    %416 = vmatprep.subr.mxu0 0.0
    %417 = vmatpush1.msra.mxu0 0.0
    %418 = vmatprep.subr.mxu0 0.0
    %419 = vmatpush1.msra.mxu0 0.0
    %420 = vmatprep.subr.mxu0 0.0
    %421 = vmatpush1.msra.mxu0 0.0
    %422 = vmatprep.subr.mxu0 0.0
    %423 = vmatpush1.msra.mxu0 0.0
    %424 = vmatprep.subr.mxu0 0.0
    %425 = vmatpush1.msra.mxu0 0.0
    %426 = vmatprep.subr.mxu0 0.0
    %427 = vmatpush1.msra.mxu0 0.0
    %428 = vmatprep.subr.mxu0 0.0
    %429 = vmatpush1.msra.mxu0 0.0
    %430 = vmatprep.subr.mxu0 0.0
    %431 = vmatpush1.msra.mxu0 0.0
    %432 = vmatprep.subr.mxu0 0.0
    %433 = vmatpush1.msra.mxu0 0.0
    %434 = vmatprep.subr.mxu0 0.0
    %435 = vmatpush1.msra.mxu0 0.0
    %436 = vmatprep.subr.mxu0 0.0
    %437 = vmatpush1.msra.mxu0 0.0
    %438 = vmatprep.subr.mxu0 0.0
    %439 = vmatpush1.msra.mxu0 0.0
    %440 = vmatprep.mubr.f32.mxu0 0.0
    %441 = vmatmul.mubr.f32.gmra.mrb[0].mxu0 %v354
    %v442 = vpop.f32.mrb[0].mxu0
    %v443 = vadd.f32 %v375, %v442
    %v444 = vpop.f32.mrb[0].mxu0
    %445 = vdwg.mxu0
    %446 = vst [vmem:[#allocation12] sm:$0xff] %v443
    // Predicated region
    $region50: #{tpu_custom_call.1} parent=1 // pred_check
      _
    $region51: #{tpu_custom_call.1} parent=1 // pred_check_branch
      %448 = sbr.rel (0) target = $region53
    $region52: #{tpu_custom_call.1} parent=1 // pred_region
      %s450 = ssub.s32 128, 128
      %451 = vsyncadd [#allocation5], %s450
      %s453 = sshll.u32 [#allocation12], 4
      %s454 = int_to_ptr.vmem [resolvable:$true] %s453
      %456 = dma.vmem_to_hbm [thread:$0]  %s454, 128, %s7, [#allocation5]
    $region53: #{tpu_custom_call.1} parent=1 // pred_fallthru
      _
    // Predicated region
    $region54: #{tpu_custom_call.1} parent=1 // pred_check
      _
    $region55: #{tpu_custom_call.1} parent=1 // pred_check_branch
      %458 = sbr.rel (0) target = $region57
    $region56: #{tpu_custom_call.1} parent=1 // pred_region
      %459 = dma.done [#allocation5], 128
    $region57: #{tpu_custom_call.1} parent=1 // pred_fallthru
      _
    %460 = vsyncpa [#allocation4], 1
    %461 = vsyncpa [#allocation7], 1
    %462 = vsyncpa [#allocation10], 1
    %463 = vsyncpa [#allocation5], 1

</llo_original>
